<compile_context>
chip_gen: v7x
topology: tpu7x:2x2x1
jax: 0.10.0
libtpu: 0.0.40
codegen_flags: <defaults>
</compile_context>

<pallas_src>
import jax
import jax.numpy as jnp
from jax.experimental import pallas as pl
from jax.experimental.pallas import tpu as pltpu

MAX_TILE_B = 2048  # batch rows per grid step; safe on v5e/v6e/v7x VMEM budgets


def dqn_kernel(x_ref,
               w1_ref, b1_ref,
               w2_ref, b2_ref,
               w3_ref, b3_ref,
               w4_ref, b4_ref,
               out_ref):
    # x arrives pre-cast to bf16 from the wrapper; MXU operands bf16,
    # accumulate f32, bias + ReLU epilogues in f32.
    h = jnp.dot(x_ref[...], w1_ref[...], preferred_element_type=jnp.float32)
    h = jnp.maximum(h + b1_ref[...], 0.0)

    h = jnp.dot(h.astype(jnp.bfloat16), w2_ref[...],
                preferred_element_type=jnp.float32)
    h = jnp.maximum(h + b2_ref[...], 0.0)

    h = jnp.dot(h.astype(jnp.bfloat16), w3_ref[...],
                preferred_element_type=jnp.float32)
    h = jnp.maximum(h + b3_ref[...], 0.0)

    # output layer: (tile_b, action_dim), no activation. Masked store for
    # action_dim < 128 is hidden under the MXU-bound compute.
    o = jnp.dot(h.astype(jnp.bfloat16), w4_ref[...],
                preferred_element_type=jnp.float32)
    out_ref[...] = (o + b4_ref[...]).astype(out_ref.dtype)


def _round_up(x, m):
    return ((x + m - 1) // m) * m


def _choose_tile_b(batch, max_tile=MAX_TILE_B):
    """Pick a batch tile that (a) is a multiple of 8 (sublane), (b) divides the
    padded batch nearly evenly (kernel is MXU-bound => padded rows are paid in
    full) and (c) gives >= 2 grid steps when possible so v7x's two TensorCores
    both get work."""
    padded = _round_up(batch, 8)
    if padded <= 8:
        return 8
    n_tiles = max(2, pl.cdiv(padded, max_tile))
    return _round_up(pl.cdiv(padded, n_tiles), 8)


def init_params(key, input_dim, action_dim):
    """Deterministic synthetic init (PyTorch-like uniform fan-in scaling).

    Weights are stored transposed vs. PyTorch, i.e. W_l is [in, out], so each
    layer is y = x @ W_l + b_l (identical math to nn.Linear)."""
    dims = [(input_dim, 128), (128, 256), (256, 128), (128, action_dim)]
    params = {}
    for i, (d_in, d_out) in enumerate(dims, start=1):
        key, kw, kb = jax.random.split(key, 3)
        bound = 1.0 / jnp.sqrt(d_in)
        params[f"w{i}"] = jax.random.uniform(
            kw, (d_in, d_out), jnp.float32, -bound, bound)
        # biases kept 2-D [1, d_out] so they broadcast cleanly in the kernel
        params[f"b{i}"] = jax.random.uniform(
            kb, (1, d_out), jnp.float32, -bound, bound)
    return params


def prepare_params(params):
    """One-time prep: cast weights to bf16 (MXU operands), biases stay f32."""
    prep = {}
    for i in (1, 2, 3, 4):
        prep[f"w{i}"] = params[f"w{i}"].astype(jnp.bfloat16)
        prep[f"b{i}"] = params[f"b{i}"].astype(jnp.float32)
    return prep


def dqn_forward(x, prep, action_dim):
    """x: [batch, input_dim] f32. prep: output of prepare_params."""
    batch, input_dim = x.shape

    tile_b = _choose_tile_b(batch)
    padded_batch = _round_up(batch, tile_b)

    # Cast x to bf16 once in the wrapper (halves x DMA + VMEM tile footprint).
    x = x.astype(jnp.bfloat16)
    if padded_batch != batch:
        x = jnp.pad(x, ((0, padded_batch - batch), (0, 0)))

    grid = (padded_batch // tile_b,)

    def resident(arr):
        # constant block index + full-shape block => stays VMEM-resident
        # across grid steps, no per-tile re-DMA.
        return pl.BlockSpec(arr.shape, lambda i: (0, 0))

    out = pl.pallas_call(
        dqn_kernel,
        out_shape=jax.ShapeDtypeStruct((padded_batch, action_dim), jnp.float32),
        grid=grid,
        in_specs=[
            pl.BlockSpec((tile_b, input_dim), lambda i: (i, 0)),   # x tile
            resident(prep["w1"]), resident(prep["b1"]),
            resident(prep["w2"]), resident(prep["b2"]),
            resident(prep["w3"]), resident(prep["b3"]),
            resident(prep["w4"]), resident(prep["b4"]),
        ],
        # last dim == full array dim (action_dim) is legal; masked vst is
        # hidden under the MXU-bound compute and avoids 32x output inflation.
        out_specs=pl.BlockSpec((tile_b, action_dim), lambda i: (i, 0)),
        compiler_params=pltpu.CompilerParams(
            dimension_semantics=("parallel",),   # megacore sharding on v7x
            vmem_limit_bytes=32 * 1024 * 1024,   # ample; live footprint <10MiB
        ),
    )(x,
      prep["w1"], prep["b1"],
      prep["w2"], prep["b2"],
      prep["w3"], prep["b3"],
      prep["w4"], prep["b4"])

    # padded rows hold ReLU(bias)-derived garbage -> must be discarded.
    return out[:batch]


def dqn_reference(x, prep, action_dim):
    """Pure-JAX reference mimicking the kernel's bf16-operand / f32-acc math."""
    f32 = jnp.float32
    xb = x.astype(jnp.bfloat16)
    h = jnp.dot(xb, prep["w1"], preferred_element_type=f32)
    h = jnp.maximum(h + prep["b1"], 0.0)
    h = jnp.dot(h.astype(jnp.bfloat16), prep["w2"], preferred_element_type=f32)
    h = jnp.maximum(h + prep["b2"], 0.0)
    h = jnp.dot(h.astype(jnp.bfloat16), prep["w3"], preferred_element_type=f32)
    h = jnp.maximum(h + prep["b3"], 0.0)
    o = jnp.dot(h.astype(jnp.bfloat16), prep["w4"], preferred_element_type=f32)
    return o + prep["b4"]


if __name__ == "__main__":
    key = jax.random.PRNGKey(0)
    batch, input_dim, action_dim = 8, 16, 4

    key, kx = jax.random.split(key)
    x = jax.random.normal(kx, (batch, input_dim), jnp.float32)
    params = init_params(key, input_dim, action_dim)
    prep = prepare_params(params)

    out = dqn_forward(x, prep, action_dim)
    jax.block_until_ready(out)
    assert out.shape == (batch, action_dim)

    # match against same-precision (bf16-operand / f32-acc) reference
    ref = dqn_reference(x, prep, action_dim)
    assert jnp.allclose(out, ref, atol=2e-3, rtol=2e-3)

    # sanity vs. full-f32 nn.Linear math (bf16 weights => loose tolerance)
    ref_f32 = x @ params["w1"] + params["b1"]
    ref_f32 = jnp.maximum(ref_f32, 0.0) @ params["w2"] + params["b2"]
    ref_f32 = jnp.maximum(ref_f32, 0.0) @ params["w3"] + params["b3"]
    ref_f32 = jnp.maximum(ref_f32, 0.0) @ params["w4"] + params["b4"]
    assert jnp.allclose(out, ref_f32, atol=5e-2, rtol=5e-2)

    print("KERNEL_OK")
</pallas_src>

<mosaic_0001>
module attributes {stable_mosaic.version = 11 : i64} {
  func.func @dqn_kernel(%arg0: i32, %arg1: memref<8x16xbf16, #tpu.memory_space<vmem>>, %arg2: memref<16x128xbf16, #tpu.memory_space<vmem>>, %arg3: memref<1x128xf32, #tpu.memory_space<vmem>>, %arg4: memref<128x256xbf16, #tpu.memory_space<vmem>>, %arg5: memref<1x256xf32, #tpu.memory_space<vmem>>, %arg6: memref<256x128xbf16, #tpu.memory_space<vmem>>, %arg7: memref<1x128xf32, #tpu.memory_space<vmem>>, %arg8: memref<128x4xbf16, #tpu.memory_space<vmem>>, %arg9: memref<1x4xf32, #tpu.memory_space<vmem>>, %arg10: memref<8x4xf32, #tpu.memory_space<vmem>>) attributes {dimension_semantics = [#tpu.dimension_semantics<parallel>], iteration_bounds = array<i64: 1>, scalar_prefetch = 0 : i64, scratch_operands = 0 : i64, tpu.core_type = #tpu.core_type<tc>, window_params = [{transform_indices = @transform_0, window_bounds = array<i64: 8, 16>}, {pipeline_mode = #tpu.pipeline_mode<synchronous>, transform_indices = @transform_1, window_bounds = array<i64: 16, 128>}, {pipeline_mode = #tpu.pipeline_mode<synchronous>, transform_indices = @transform_2, window_bounds = array<i64: 1, 128>}, {pipeline_mode = #tpu.pipeline_mode<synchronous>, transform_indices = @transform_3, window_bounds = array<i64: 128, 256>}, {pipeline_mode = #tpu.pipeline_mode<synchronous>, transform_indices = @transform_4, window_bounds = array<i64: 1, 256>}, {pipeline_mode = #tpu.pipeline_mode<synchronous>, transform_indices = @transform_5, window_bounds = array<i64: 256, 128>}, {pipeline_mode = #tpu.pipeline_mode<synchronous>, transform_indices = @transform_6, window_bounds = array<i64: 1, 128>}, {pipeline_mode = #tpu.pipeline_mode<synchronous>, transform_indices = @transform_7, window_bounds = array<i64: 128, 4>}, {pipeline_mode = #tpu.pipeline_mode<synchronous>, transform_indices = @transform_8, window_bounds = array<i64: 1, 4>}, {transform_indices = @transform_9, window_bounds = array<i64: 8, 4>}]} {
    %c0 = arith.constant 0 : index
    %c0_0 = arith.constant 0 : index
    %0 = vector.load %arg1[%c0, %c0_0] : memref<8x16xbf16, #tpu.memory_space<vmem>>, vector<8x16xbf16>
    %c0_1 = arith.constant 0 : index
    %c0_2 = arith.constant 0 : index
    %1 = vector.load %arg2[%c0_1, %c0_2] : memref<16x128xbf16, #tpu.memory_space<vmem>>, vector<16x128xbf16>
    %cst = arith.constant dense<0.000000e+00> : vector<8x128xf32>
    %2 = tpu.matmul %0, %1, %cst {dimension_numbers = #tpu.dot_dimension_numbers<[1], [0], [0], [1], [0, 0, 1, 1], [], []>} : vector<8x16xbf16>, vector<16x128xbf16>, vector<8x128xf32> -> vector<8x128xf32>
    %c0_3 = arith.constant 0 : index
    %c0_4 = arith.constant 0 : index
    %3 = vector.load %arg3[%c0_3, %c0_4] : memref<1x128xf32, #tpu.memory_space<vmem>>, vector<1x128xf32>
    %4 = vector.broadcast %3 : vector<1x128xf32> to vector<8x128xf32>
    %5 = arith.addf %2, %4 : vector<8x128xf32>
    %cst_5 = arith.constant 0.000000e+00 : f32
    %6 = vector.broadcast %cst_5 : f32 to vector<8x128xf32>
    %7 = arith.maximumf %5, %6 : vector<8x128xf32>
    %8 = arith.truncf %7 : vector<8x128xf32> to vector<8x128xbf16>
    %c0_6 = arith.constant 0 : index
    %c0_7 = arith.constant 0 : index
    %9 = vector.load %arg4[%c0_6, %c0_7] : memref<128x256xbf16, #tpu.memory_space<vmem>>, vector<128x256xbf16>
    %cst_8 = arith.constant dense<0.000000e+00> : vector<8x256xf32>
    %10 = tpu.matmul %8, %9, %cst_8 {dimension_numbers = #tpu.dot_dimension_numbers<[1], [0], [0], [1], [0, 0, 1, 1], [], []>} : vector<8x128xbf16>, vector<128x256xbf16>, vector<8x256xf32> -> vector<8x256xf32>
    %c0_9 = arith.constant 0 : index
    %c0_10 = arith.constant 0 : index
    %11 = vector.load %arg5[%c0_9, %c0_10] : memref<1x256xf32, #tpu.memory_space<vmem>>, vector<1x256xf32>
    %12 = vector.broadcast %11 : vector<1x256xf32> to vector<8x256xf32>
    %13 = arith.addf %10, %12 : vector<8x256xf32>
    %cst_11 = arith.constant 0.000000e+00 : f32
    %14 = vector.broadcast %cst_11 : f32 to vector<8x256xf32>
    %15 = arith.maximumf %13, %14 : vector<8x256xf32>
    %16 = arith.truncf %15 : vector<8x256xf32> to vector<8x256xbf16>
    %c0_12 = arith.constant 0 : index
    %c0_13 = arith.constant 0 : index
    %17 = vector.load %arg6[%c0_12, %c0_13] : memref<256x128xbf16, #tpu.memory_space<vmem>>, vector<256x128xbf16>
    %cst_14 = arith.constant dense<0.000000e+00> : vector<8x128xf32>
    %18 = tpu.matmul %16, %17, %cst_14 {dimension_numbers = #tpu.dot_dimension_numbers<[1], [0], [0], [1], [0, 0, 1, 1], [], []>} : vector<8x256xbf16>, vector<256x128xbf16>, vector<8x128xf32> -> vector<8x128xf32>
    %c0_15 = arith.constant 0 : index
    %c0_16 = arith.constant 0 : index
    %19 = vector.load %arg7[%c0_15, %c0_16] : memref<1x128xf32, #tpu.memory_space<vmem>>, vector<1x128xf32>
    %20 = vector.broadcast %19 : vector<1x128xf32> to vector<8x128xf32>
    %21 = arith.addf %18, %20 : vector<8x128xf32>
    %cst_17 = arith.constant 0.000000e+00 : f32
    %22 = vector.broadcast %cst_17 : f32 to vector<8x128xf32>
    %23 = arith.maximumf %21, %22 : vector<8x128xf32>
    %24 = arith.truncf %23 : vector<8x128xf32> to vector<8x128xbf16>
    %c0_18 = arith.constant 0 : index
    %c0_19 = arith.constant 0 : index
    %25 = vector.load %arg8[%c0_18, %c0_19] : memref<128x4xbf16, #tpu.memory_space<vmem>>, vector<128x4xbf16>
    %cst_20 = arith.constant dense<0.000000e+00> : vector<8x4xf32>
    %26 = tpu.matmul %24, %25, %cst_20 {dimension_numbers = #tpu.dot_dimension_numbers<[1], [0], [0], [1], [0, 0, 1, 1], [], []>} : vector<8x128xbf16>, vector<128x4xbf16>, vector<8x4xf32> -> vector<8x4xf32>
    %c0_21 = arith.constant 0 : index
    %c0_22 = arith.constant 0 : index
    %27 = vector.load %arg9[%c0_21, %c0_22] : memref<1x4xf32, #tpu.memory_space<vmem>>, vector<1x4xf32>
    %28 = vector.broadcast %27 : vector<1x4xf32> to vector<8x4xf32>
    %29 = arith.addf %26, %28 : vector<8x4xf32>
    %c0_23 = arith.constant 0 : index
    %c0_24 = arith.constant 0 : index
    %30 = vector.load %arg10[%c0_23, %c0_24] : memref<8x4xf32, #tpu.memory_space<vmem>>, vector<8x4xf32>
    tpu.vector_store %arg10[%c0_23, %c0_24], %29 {strides = array<i32>} : memref<8x4xf32, #tpu.memory_space<vmem>>, vector<8x4xf32>,
    return
  }
  func.func @transform_0(%arg0: i32) -> (i32, i32) {
    %c0_i32 = arith.constant 0 : i32
    %c0_i32_0 = arith.constant 0 : i32
    return %arg0, %c0_i32 : i32, i32
  }
  func.func @transform_1(%arg0: i32) -> (i32, i32) {
    %c0_i32 = arith.constant 0 : i32
    %c0_i32_0 = arith.constant 0 : i32
    %c0_i32_1 = arith.constant 0 : i32
    return %c0_i32, %c0_i32_0 : i32, i32
  }
  func.func @transform_2(%arg0: i32) -> (i32, i32) {
    %c0_i32 = arith.constant 0 : i32
    %c0_i32_0 = arith.constant 0 : i32
    %c0_i32_1 = arith.constant 0 : i32
    return %c0_i32, %c0_i32_0 : i32, i32
  }
  func.func @transform_3(%arg0: i32) -> (i32, i32) {
    %c0_i32 = arith.constant 0 : i32
    %c0_i32_0 = arith.constant 0 : i32
    %c0_i32_1 = arith.constant 0 : i32
    return %c0_i32, %c0_i32_0 : i32, i32
  }
  func.func @transform_4(%arg0: i32) -> (i32, i32) {
    %c0_i32 = arith.constant 0 : i32
    %c0_i32_0 = arith.constant 0 : i32
    %c0_i32_1 = arith.constant 0 : i32
    return %c0_i32, %c0_i32_0 : i32, i32
  }
  func.func @transform_5(%arg0: i32) -> (i32, i32) {
    %c0_i32 = arith.constant 0 : i32
    %c0_i32_0 = arith.constant 0 : i32
    %c0_i32_1 = arith.constant 0 : i32
    return %c0_i32, %c0_i32_0 : i32, i32
  }
  func.func @transform_6(%arg0: i32) -> (i32, i32) {
    %c0_i32 = arith.constant 0 : i32
    %c0_i32_0 = arith.constant 0 : i32
    %c0_i32_1 = arith.constant 0 : i32
    return %c0_i32, %c0_i32_0 : i32, i32
  }
  func.func @transform_7(%arg0: i32) -> (i32, i32) {
    %c0_i32 = arith.constant 0 : i32
    %c0_i32_0 = arith.constant 0 : i32
    %c0_i32_1 = arith.constant 0 : i32
    return %c0_i32, %c0_i32_0 : i32, i32
  }
  func.func @transform_8(%arg0: i32) -> (i32, i32) {
    %c0_i32 = arith.constant 0 : i32
    %c0_i32_0 = arith.constant 0 : i32
    %c0_i32_1 = arith.constant 0 : i32
    return %c0_i32, %c0_i32_0 : i32, i32
  }
  func.func @transform_9(%arg0: i32) -> (i32, i32) {
    %c0_i32 = arith.constant 0 : i32
    %c0_i32_0 = arith.constant 0 : i32
    return %arg0, %c0_i32 : i32, i32
  }
}

</mosaic_0001>

<llo_original>
// kernel: tpu_custom_call.1
$region0: #{tpu_custom_call.1}
  #allocation0 [shape = 'u32[]', space=smem, size = 0x4, offset = 0x4, fixed_abs, tag = 'smem constant byte address 0x4 - core index']
  #allocation1 [shape = 'u32[144,128]{1,0:T(1,128)}', space=vmem, size = 0x12000, scoped, tag = 'internal scratch']
  %s0 = inlined_call_operand.vmem [shape: bf16[8,16], index: 0, kind: input, shape index: {}]
  %s1 = inlined_call_operand.vmem [shape: bf16[16,128], index: 1, kind: input, shape index: {}]
  %s2 = inlined_call_operand.vmem [shape: f32[1,128], index: 2, kind: input, shape index: {}]
  %s3 = inlined_call_operand.hbm [shape: bf16[128,256], index: 3, kind: input, shape index: {}]
  %s4 = inlined_call_operand.vmem [shape: f32[1,256], index: 4, kind: input, shape index: {}]
  %s5 = inlined_call_operand.hbm [shape: bf16[256,128], index: 5, kind: input, shape index: {}]
  %s6 = inlined_call_operand.vmem [shape: f32[1,128], index: 6, kind: input, shape index: {}]
  %s7 = inlined_call_operand.vmem [shape: bf16[128,4], index: 7, kind: input, shape index: {}]
  %s8 = inlined_call_operand.vmem [shape: f32[1,4], index: 8, kind: input, shape index: {}]
  %s9 = inlined_call_operand.vmem [shape: f32[8,4], index: 9, kind: output, shape index: {}]
  %s10 = sld [smem:[#allocation0]]
  $region54: #{tpu_custom_call.1} parent=0
    _
  %s12 = ssub.s32 1, %s10
  %s13 = scalar_select 0, %s12, %s10
  $region1: #{tpu_custom_call.1} parent=0
    #allocation2 [shape = 'u8[65536]{0}', space=vmem, size = 0x10000, scoped, tag = 'input window, operand 3, single buffered']
    #allocation3 [shape = 's32[1]{0}', space=sflag, size = 0x4, scoped, tag = 'scoped memory for tpu_custom_call.1']
    #allocation4 [shape = 'u8[65536]{0}', space=vmem, size = 0x10000, scoped, tag = 'input window, operand 5, single buffered']
    #allocation5 [shape = 's32[1]{0}', space=sflag, size = 0x4, scoped, tag = 'scoped memory for tpu_custom_call.1']
    %14 = vsyncpa [#allocation3], 0
    %15 = vsyncpa [#allocation5], 0
    // Predicated region
    $region2: #{tpu_custom_call.1} parent=1 // pred_check
      _
    $region3: #{tpu_custom_call.1} parent=1 // pred_check_branch
      %17 = sbr.rel (0) target = $region5
    $region4: #{tpu_custom_call.1} parent=1 // pred_region
      _
    $region5: #{tpu_custom_call.1} parent=1 // pred_fallthru
      _
    // Predicated region
    $region6: #{tpu_custom_call.1} parent=1 // pred_check
      _
    $region7: #{tpu_custom_call.1} parent=1 // pred_check_branch
      %19 = sbr.rel (0) target = $region9
    $region8: #{tpu_custom_call.1} parent=1 // pred_region
      _
    $region9: #{tpu_custom_call.1} parent=1 // pred_fallthru
      _
    // Predicated region
    $region10: #{tpu_custom_call.1} parent=1 // pred_check
      _
    $region11: #{tpu_custom_call.1} parent=1 // pred_check_branch
      %21 = sbr.rel (0) target = $region13
    $region12: #{tpu_custom_call.1} parent=1 // pred_region
      _
    $region13: #{tpu_custom_call.1} parent=1 // pred_fallthru
      _
    // Predicated region
    $region14: #{tpu_custom_call.1} parent=1 // pred_check
      _
    $region15: #{tpu_custom_call.1} parent=1 // pred_check_branch
      %23 = sbr.rel (0) target = $region17
    $region16: #{tpu_custom_call.1} parent=1 // pred_region
      %s25 = ssub.s32 2048, 2048
      %26 = vsyncadd [#allocation3], %s25
      %s27 = sshll.u32 [#allocation2], 4
      %s28 = int_to_ptr.vmem [resolvable:$true] %s27
      %33 = dma.hbm_to_vmem [thread:$0]  %s3, 2048, %s28, [#allocation3], 128, 128, 8
    $region17: #{tpu_custom_call.1} parent=1 // pred_fallthru
      _
    // Predicated region
    $region18: #{tpu_custom_call.1} parent=1 // pred_check
      _
    $region19: #{tpu_custom_call.1} parent=1 // pred_check_branch
      %35 = sbr.rel (0) target = $region21
    $region20: #{tpu_custom_call.1} parent=1 // pred_region
      _
    $region21: #{tpu_custom_call.1} parent=1 // pred_fallthru
      _
    // Predicated region
    $region22: #{tpu_custom_call.1} parent=1 // pred_check
      _
    $region23: #{tpu_custom_call.1} parent=1 // pred_check_branch
      %37 = sbr.rel (0) target = $region25
    $region24: #{tpu_custom_call.1} parent=1 // pred_region
      %s39 = ssub.s32 2048, 2048
      %40 = vsyncadd [#allocation5], %s39
      %s41 = sshll.u32 [#allocation4], 4
      %s42 = int_to_ptr.vmem [resolvable:$true] %s41
      %47 = dma.hbm_to_vmem [thread:$0]  %s5, 2048, %s42, [#allocation5], 64, 64, 4
    $region25: #{tpu_custom_call.1} parent=1 // pred_fallthru
      _
    // Predicated region
    $region26: #{tpu_custom_call.1} parent=1 // pred_check
      _
    $region27: #{tpu_custom_call.1} parent=1 // pred_check_branch
      %49 = sbr.rel (0) target = $region29
    $region28: #{tpu_custom_call.1} parent=1 // pred_region
      _
    $region29: #{tpu_custom_call.1} parent=1 // pred_fallthru
      _
    // Predicated region
    $region30: #{tpu_custom_call.1} parent=1 // pred_check
      _
    $region31: #{tpu_custom_call.1} parent=1 // pred_check_branch
      %51 = sbr.rel (0) target = $region33
    $region32: #{tpu_custom_call.1} parent=1 // pred_region
      _
    $region33: #{tpu_custom_call.1} parent=1 // pred_fallthru
      _
    // Predicated region
    $region34: #{tpu_custom_call.1} parent=1 // pred_check
      _
    $region35: #{tpu_custom_call.1} parent=1 // pred_check_branch
      %53 = sbr.rel (0) target = $region37
    $region36: #{tpu_custom_call.1} parent=1 // pred_region
      _
    $region37: #{tpu_custom_call.1} parent=1 // pred_fallthru
      _
    // Predicated region
    $region38: #{tpu_custom_call.1} parent=1 // pred_check
      _
    $region39: #{tpu_custom_call.1} parent=1 // pred_check_branch
      %55 = sbr.rel (0) target = $region41
    $region40: #{tpu_custom_call.1} parent=1 // pred_region
      %56 = dma.done [#allocation3], 2048
    $region41: #{tpu_custom_call.1} parent=1 // pred_fallthru
      _
    // Predicated region
    $region42: #{tpu_custom_call.1} parent=1 // pred_check
      _
    $region43: #{tpu_custom_call.1} parent=1 // pred_check_branch
      %58 = sbr.rel (0) target = $region45
    $region44: #{tpu_custom_call.1} parent=1 // pred_region
      %59 = dma.done [#allocation5], 2048
    $region45: #{tpu_custom_call.1} parent=1 // pred_fallthru
      _
    %v61 = vld [vmem:[%s0] sm:$0xf]
    %v62 = vld [vmem:[%s1] sm:$0xf]
    %v63 = vld [vmem:[%s1 + $0x4] sm:$0xf]
    %v64 = vld [vmem:[%s2] sm:$0x1]
    %v66 = vlaneseq
    %v67 = vshrl.u32 %v66, 7
    %v68 = vsub.s32 0, %v67
    %v69 = vrot.slane %v64, %v68
    %v73 = vunpack.c.l.b16 %v62
    %v74 = vunpack.c.l.b16 %v63
    %v75 = vpack.c.b16 %v74, %v73
    %vm77 = vcmask 130048
    %v79 = vsel %vm77, %v61, 0
    %81 = vmatprep.subr.bf16.mxu0 0
    %82 = vmatpush1.bf16.msra.mxu0 %v75
    %83 = vmatprep.subr.bf16.mxu0 0
    %84 = vmatpush1.bf16.msra.mxu0 0
    %85 = vmatprep.subr.bf16.mxu0 0
    %86 = vmatpush1.bf16.msra.mxu0 0
    %87 = vmatprep.subr.bf16.mxu0 0
    %88 = vmatpush1.bf16.msra.mxu0 0
    %89 = vmatprep.subr.bf16.mxu0 0
    %90 = vmatpush1.bf16.msra.mxu0 0
    %91 = vmatprep.subr.bf16.mxu0 0
    %92 = vmatpush1.bf16.msra.mxu0 0
    %93 = vmatprep.subr.bf16.mxu0 0
    %94 = vmatpush1.bf16.msra.mxu0 0
    %95 = vmatprep.subr.bf16.mxu0 0
    %96 = vmatpush1.bf16.msra.mxu0 0
    %97 = vmatprep.subr.bf16.mxu0 0
    %98 = vmatpush1.bf16.msra.mxu0 0
    %99 = vmatprep.subr.bf16.mxu0 0
    %100 = vmatpush1.bf16.msra.mxu0 0
    %101 = vmatprep.subr.bf16.mxu0 0
    %102 = vmatpush1.bf16.msra.mxu0 0
    %103 = vmatprep.subr.bf16.mxu0 0
    %104 = vmatpush1.bf16.msra.mxu0 0
    %105 = vmatprep.subr.bf16.mxu0 0
    %106 = vmatpush1.bf16.msra.mxu0 0
    %107 = vmatprep.subr.bf16.mxu0 0
    %108 = vmatpush1.bf16.msra.mxu0 0
    %109 = vmatprep.subr.bf16.mxu0 0
    %110 = vmatpush1.bf16.msra.mxu0 0
    %111 = vmatprep.subr.bf16.mxu0 0
    %112 = vmatpush1.bf16.msra.mxu0 0
    %113 = vmatprep.mubr.bf16.mxu0 0
    %114 = vmatmul.mubr.bf16.gmra.mrb[0].mxu0 %v79
    %v115 = vpop.f32.mrb[0].mxu0
    %v116 = vadd.f32 %v69, %v115
    %v117 = vpop.f32.mrb[0].mxu0
    %v118 = vpop.f32.mrb[0].mxu0
    %v119 = vpop.f32.mrb[0].mxu0
    %120 = vdwg.mxu0
    %v121 = vmax.f32 %v116, 0.0
    %v122 = vpack.c.bf16 %v121, %v121
    %v123 = vld [vmem:[#allocation2] sm:$0xff]
    %v124 = vld [vmem:[#allocation2 + $0x8] sm:$0xff]
    %v125 = vld [vmem:[#allocation2 + $0x10] sm:$0xff]
    %v126 = vld [vmem:[#allocation2 + $0x18] sm:$0xff]
    %v127 = vld [vmem:[#allocation2 + $0x20] sm:$0xff]
    %v128 = vld [vmem:[#allocation2 + $0x28] sm:$0xff]
    %v129 = vld [vmem:[#allocation2 + $0x30] sm:$0xff]
    %v130 = vld [vmem:[#allocation2 + $0x38] sm:$0xff]
    %v131 = vld [vmem:[#allocation2 + $0x40] sm:$0xff]
    %v132 = vld [vmem:[#allocation2 + $0x48] sm:$0xff]
    %v133 = vld [vmem:[#allocation2 + $0x50] sm:$0xff]
    %v134 = vld [vmem:[#allocation2 + $0x58] sm:$0xff]
    %v135 = vld [vmem:[#allocation2 + $0x60] sm:$0xff]
    %v136 = vld [vmem:[#allocation2 + $0x68] sm:$0xff]
    %v137 = vld [vmem:[#allocation2 + $0x70] sm:$0xff]
    %v138 = vld [vmem:[#allocation2 + $0x78] sm:$0xff]
    %v139 = vld [vmem:[%s4] sm:$0x3]
    %v141 = vlaneseq
    %v142 = vshrl.u32 %v141, 7
    %v143 = vsub.s32 0, %v142
    %v144 = vrot.slane %v139, %v143
    %v145 = vlaneseq
    %v146 = vshrl.u32 %v145, 7
    %v147 = vsub.s32 1, %v146
    %v148 = vrot.slane %v139, %v147
    %v167 = vunpack.c.l.b16 %v123
    %v168 = vunpack.c.h.b16 %v123
    %v169 = vunpack.c.l.b16 %v124
    %v170 = vunpack.c.h.b16 %v124
    %v171 = vunpack.c.l.b16 %v125
    %v172 = vunpack.c.h.b16 %v125
    %v173 = vunpack.c.l.b16 %v126
    %v174 = vunpack.c.h.b16 %v126
    %v175 = vunpack.c.l.b16 %v127
    %v176 = vunpack.c.h.b16 %v127
    %v177 = vunpack.c.l.b16 %v128
    %v178 = vunpack.c.h.b16 %v128
    %v179 = vunpack.c.l.b16 %v129
    %v180 = vunpack.c.h.b16 %v129
    %v181 = vunpack.c.l.b16 %v130
    %v182 = vunpack.c.h.b16 %v130
    %v183 = vunpack.c.l.b16 %v131
    %v184 = vunpack.c.h.b16 %v131
    %v185 = vunpack.c.l.b16 %v132
    %v186 = vunpack.c.h.b16 %v132
    %v187 = vunpack.c.l.b16 %v133
    %v188 = vunpack.c.h.b16 %v133
    %v189 = vunpack.c.l.b16 %v134
    %v190 = vunpack.c.h.b16 %v134
    %v191 = vunpack.c.l.b16 %v135
    %v192 = vunpack.c.h.b16 %v135
    %v193 = vunpack.c.l.b16 %v136
    %v194 = vunpack.c.h.b16 %v136
    %v195 = vunpack.c.l.b16 %v137
    %v196 = vunpack.c.h.b16 %v137
    %v197 = vunpack.c.l.b16 %v138
    %v198 = vunpack.c.h.b16 %v138
    %v199 = vpack.c.b16 %v169, %v167
    %v200 = vpack.c.b16 %v170, %v168
    %v201 = vpack.c.b16 %v173, %v171
    %v202 = vpack.c.b16 %v174, %v172
    %v203 = vpack.c.b16 %v177, %v175
    %v204 = vpack.c.b16 %v178, %v176
    %v205 = vpack.c.b16 %v181, %v179
    %v206 = vpack.c.b16 %v182, %v180
    %v207 = vpack.c.b16 %v185, %v183
    %v208 = vpack.c.b16 %v186, %v184
    %v209 = vpack.c.b16 %v189, %v187
    %v210 = vpack.c.b16 %v190, %v188
    %v211 = vpack.c.b16 %v193, %v191
    %v212 = vpack.c.b16 %v194, %v192
    %v213 = vpack.c.b16 %v197, %v195
    %v214 = vpack.c.b16 %v198, %v196
    %231 = vmatprep.subr.bf16.mxu0 %v200
    %232 = vmatpush1.bf16.msra.mxu0 %v199
    %233 = vmatprep.subr.bf16.mxu0 %v202
    %234 = vmatpush1.bf16.msra.mxu0 %v201
    %235 = vmatprep.subr.bf16.mxu0 %v204
    %236 = vmatpush1.bf16.msra.mxu0 %v203
    %237 = vmatprep.subr.bf16.mxu0 %v206
    %238 = vmatpush1.bf16.msra.mxu0 %v205
    %239 = vmatprep.subr.bf16.mxu0 %v208
    %240 = vmatpush1.bf16.msra.mxu0 %v207
    %241 = vmatprep.subr.bf16.mxu0 %v210
    %242 = vmatpush1.bf16.msra.mxu0 %v209
    %243 = vmatprep.subr.bf16.mxu0 %v212
    %244 = vmatpush1.bf16.msra.mxu0 %v211
    %245 = vmatprep.subr.bf16.mxu0 %v214
    %246 = vmatpush1.bf16.msra.mxu0 %v213
    %247 = vmatprep.subr.bf16.mxu0 0
    %248 = vmatpush1.bf16.msra.mxu0 0
    %249 = vmatprep.subr.bf16.mxu0 0
    %250 = vmatpush1.bf16.msra.mxu0 0
    %251 = vmatprep.subr.bf16.mxu0 0
    %252 = vmatpush1.bf16.msra.mxu0 0
    %253 = vmatprep.subr.bf16.mxu0 0
    %254 = vmatpush1.bf16.msra.mxu0 0
    %255 = vmatprep.subr.bf16.mxu0 0
    %256 = vmatpush1.bf16.msra.mxu0 0
    %257 = vmatprep.subr.bf16.mxu0 0
    %258 = vmatpush1.bf16.msra.mxu0 0
    %259 = vmatprep.subr.bf16.mxu0 0
    %260 = vmatpush1.bf16.msra.mxu0 0
    %261 = vmatprep.subr.bf16.mxu0 0
    %262 = vmatpush1.bf16.msra.mxu0 0
    %263 = vmatprep.mubr.bf16.mxu0 0
    %264 = vmatmul.mubr.bf16.gmra.mrb[0].mxu0 %v122
    %v265 = vpop.f32.mrb[0].mxu0
    %v266 = vadd.f32 %v144, %v265
    %v267 = vpop.f32.mrb[0].mxu0
    %v268 = vadd.f32 %v148, %v267
    %v269 = vpop.f32.mrb[0].mxu0
    %v270 = vpop.f32.mrb[0].mxu0
    %271 = vdwg.mxu0
    %v272 = vmax.f32 %v266, 0.0
    %v273 = vmax.f32 %v268, 0.0
    %v274 = vpack.c.bf16 %v272, %v272
    %v275 = vpack.c.bf16 %v273, %v273
    %v276 = vld [vmem:[#allocation4] sm:$0xf]
    %v277 = vld [vmem:[#allocation4 + $0x4] sm:$0xf]
    %v278 = vld [vmem:[#allocation4 + $0x8] sm:$0xf]
    %v279 = vld [vmem:[#allocation4 + $0xc] sm:$0xf]
    %v280 = vld [vmem:[#allocation4 + $0x10] sm:$0xf]
    %v281 = vld [vmem:[#allocation4 + $0x14] sm:$0xf]
    %v282 = vld [vmem:[#allocation4 + $0x18] sm:$0xf]
    %v283 = vld [vmem:[#allocation4 + $0x1c] sm:$0xf]
    %v284 = vld [vmem:[#allocation4 + $0x20] sm:$0xf]
    %v285 = vld [vmem:[#allocation4 + $0x24] sm:$0xf]
    %v286 = vld [vmem:[#allocation4 + $0x28] sm:$0xf]
    %v287 = vld [vmem:[#allocation4 + $0x2c] sm:$0xf]
    %v288 = vld [vmem:[#allocation4 + $0x30] sm:$0xf]
    %v289 = vld [vmem:[#allocation4 + $0x34] sm:$0xf]
    %v290 = vld [vmem:[#allocation4 + $0x38] sm:$0xf]
    %v291 = vld [vmem:[#allocation4 + $0x3c] sm:$0xf]
    %v292 = vld [vmem:[#allocation4 + $0x40] sm:$0xf]
    %v293 = vld [vmem:[#allocation4 + $0x44] sm:$0xf]
    %v294 = vld [vmem:[#allocation4 + $0x48] sm:$0xf]
    %v295 = vld [vmem:[#allocation4 + $0x4c] sm:$0xf]
    %v296 = vld [vmem:[#allocation4 + $0x50] sm:$0xf]
    %v297 = vld [vmem:[#allocation4 + $0x54] sm:$0xf]
    %v298 = vld [vmem:[#allocation4 + $0x58] sm:$0xf]
    %v299 = vld [vmem:[#allocation4 + $0x5c] sm:$0xf]
    %v300 = vld [vmem:[#allocation4 + $0x60] sm:$0xf]
    %v301 = vld [vmem:[#allocation4 + $0x64] sm:$0xf]
    %v302 = vld [vmem:[#allocation4 + $0x68] sm:$0xf]
    %v303 = vld [vmem:[#allocation4 + $0x6c] sm:$0xf]
    %v304 = vld [vmem:[#allocation4 + $0x70] sm:$0xf]
    %v305 = vld [vmem:[#allocation4 + $0x74] sm:$0xf]
    %v306 = vld [vmem:[#allocation4 + $0x78] sm:$0xf]
    %v307 = vld [vmem:[#allocation4 + $0x7c] sm:$0xf]
    %v308 = vld [vmem:[%s6] sm:$0x1]
    %v310 = vlaneseq
    %v311 = vshrl.u32 %v310, 7
    %v312 = vsub.s32 0, %v311
    %v313 = vrot.slane %v308, %v312
    %v347 = vunpack.c.l.b16 %v276
    %v348 = vunpack.c.l.b16 %v277
    %v349 = vunpack.c.l.b16 %v278
    %v350 = vunpack.c.l.b16 %v279
    %v351 = vunpack.c.l.b16 %v280
    %v352 = vunpack.c.l.b16 %v281
    %v353 = vunpack.c.l.b16 %v282
    %v354 = vunpack.c.l.b16 %v283
    %v355 = vunpack.c.l.b16 %v284
    %v356 = vunpack.c.l.b16 %v285
    %v357 = vunpack.c.l.b16 %v286
    %v358 = vunpack.c.l.b16 %v287
    %v359 = vunpack.c.l.b16 %v288
    %v360 = vunpack.c.l.b16 %v289
    %v361 = vunpack.c.l.b16 %v290
    %v362 = vunpack.c.l.b16 %v291
    %v363 = vunpack.c.l.b16 %v292
    %v364 = vunpack.c.l.b16 %v293
    %v365 = vunpack.c.l.b16 %v294
    %v366 = vunpack.c.l.b16 %v295
    %v367 = vunpack.c.l.b16 %v296
    %v368 = vunpack.c.l.b16 %v297
    %v369 = vunpack.c.l.b16 %v298
    %v370 = vunpack.c.l.b16 %v299
    %v371 = vunpack.c.l.b16 %v300
    %v372 = vunpack.c.l.b16 %v301
    %v373 = vunpack.c.l.b16 %v302
    %v374 = vunpack.c.l.b16 %v303
    %v375 = vunpack.c.l.b16 %v304
    %v376 = vunpack.c.l.b16 %v305
    %v377 = vunpack.c.l.b16 %v306
    %v378 = vunpack.c.l.b16 %v307
    %v379 = vpack.c.b16 %v348, %v347
    %v380 = vpack.c.b16 %v350, %v349
    %v381 = vpack.c.b16 %v352, %v351
    %v382 = vpack.c.b16 %v354, %v353
    %v383 = vpack.c.b16 %v356, %v355
    %v384 = vpack.c.b16 %v358, %v357
    %v385 = vpack.c.b16 %v360, %v359
    %v386 = vpack.c.b16 %v362, %v361
    %v387 = vpack.c.b16 %v364, %v363
    %v388 = vpack.c.b16 %v366, %v365
    %v389 = vpack.c.b16 %v368, %v367
    %v390 = vpack.c.b16 %v370, %v369
    %v391 = vpack.c.b16 %v372, %v371
    %v392 = vpack.c.b16 %v374, %v373
    %v393 = vpack.c.b16 %v376, %v375
    %v394 = vpack.c.b16 %v378, %v377
    %411 = vmatprep.subr.bf16.mxu0 0
    %412 = vmatpush1.bf16.msra.mxu0 %v379
    %413 = vmatprep.subr.bf16.mxu0 0
    %414 = vmatpush1.bf16.msra.mxu0 %v380
    %415 = vmatprep.subr.bf16.mxu0 0
    %416 = vmatpush1.bf16.msra.mxu0 %v381
    %417 = vmatprep.subr.bf16.mxu0 0
    %418 = vmatpush1.bf16.msra.mxu0 %v382
    %419 = vmatprep.subr.bf16.mxu0 0
    %420 = vmatpush1.bf16.msra.mxu0 %v383
    %421 = vmatprep.subr.bf16.mxu0 0
    %422 = vmatpush1.bf16.msra.mxu0 %v384
    %423 = vmatprep.subr.bf16.mxu0 0
    %424 = vmatpush1.bf16.msra.mxu0 %v385
    %425 = vmatprep.subr.bf16.mxu0 0
    %426 = vmatpush1.bf16.msra.mxu0 %v386
    %427 = vmatprep.subr.bf16.mxu0 0
    %428 = vmatpush1.bf16.msra.mxu0 %v387
    %429 = vmatprep.subr.bf16.mxu0 0
    %430 = vmatpush1.bf16.msra.mxu0 %v388
    %431 = vmatprep.subr.bf16.mxu0 0
    %432 = vmatpush1.bf16.msra.mxu0 %v389
    %433 = vmatprep.subr.bf16.mxu0 0
    %434 = vmatpush1.bf16.msra.mxu0 %v390
    %435 = vmatprep.subr.bf16.mxu0 0
    %436 = vmatpush1.bf16.msra.mxu0 %v391
    %437 = vmatprep.subr.bf16.mxu0 0
    %438 = vmatpush1.bf16.msra.mxu0 %v392
    %439 = vmatprep.subr.bf16.mxu0 0
    %440 = vmatpush1.bf16.msra.mxu0 %v393
    %441 = vmatprep.subr.bf16.mxu0 0
    %442 = vmatpush1.bf16.msra.mxu0 %v394
    %443 = vmatprep.mubr.bf16.mxu0 %v275
    %444 = vmatmul.mubr.bf16.gmra.mrb[0].mxu0 %v274
    %v445 = vpop.f32.mrb[0].mxu0
    %v446 = vadd.f32 %v313, %v445
    %v447 = vpop.f32.mrb[0].mxu0
    %v448 = vpop.f32.mrb[0].mxu0
    %v449 = vpop.f32.mrb[0].mxu0
    %450 = vdwg.mxu0
    %v451 = vmax.f32 %v446, 0.0
    %v452 = vpack.c.bf16 %v451, %v451
    %v453 = vld [vmem:[%s7] sm:$0xf]
    %v454 = vld [vmem:[%s7 + $0x4] sm:$0xf]
    %v455 = vld [vmem:[%s7 + $0x8] sm:$0xf]
    %v456 = vld [vmem:[%s7 + $0xc] sm:$0xf]
    %v457 = vld [vmem:[%s7 + $0x10] sm:$0xf]
    %v458 = vld [vmem:[%s7 + $0x14] sm:$0xf]
    %v459 = vld [vmem:[%s7 + $0x18] sm:$0xf]
    %v460 = vld [vmem:[%s7 + $0x1c] sm:$0xf]
    %v461 = vld [vmem:[%s7 + $0x20] sm:$0xf]
    %v462 = vld [vmem:[%s7 + $0x24] sm:$0xf]
    %v463 = vld [vmem:[%s7 + $0x28] sm:$0xf]
    %v464 = vld [vmem:[%s7 + $0x2c] sm:$0xf]
    %v465 = vld [vmem:[%s7 + $0x30] sm:$0xf]
    %v466 = vld [vmem:[%s7 + $0x34] sm:$0xf]
    %v467 = vld [vmem:[%s7 + $0x38] sm:$0xf]
    %v468 = vld [vmem:[%s7 + $0x3c] sm:$0xf]
    %v469 = vld [vmem:[%s8] sm:$0x1]
    %v471 = vlaneseq
    %v472 = vshrl.u32 %v471, 7
    %v473 = vsub.s32 0, %v472
    %v474 = vrot.slane %v469, %v473
    %v492 = vunpack.c.l.b16 %v453
    %v493 = vunpack.c.l.b16 %v454
    %v494 = vunpack.c.l.b16 %v455
    %v495 = vunpack.c.l.b16 %v456
    %v496 = vunpack.c.l.b16 %v457
    %v497 = vunpack.c.l.b16 %v458
    %v498 = vunpack.c.l.b16 %v459
    %v499 = vunpack.c.l.b16 %v460
    %v500 = vunpack.c.l.b16 %v461
    %v501 = vunpack.c.l.b16 %v462
    %v502 = vunpack.c.l.b16 %v463
    %v503 = vunpack.c.l.b16 %v464
    %v504 = vunpack.c.l.b16 %v465
    %v505 = vunpack.c.l.b16 %v466
    %v506 = vunpack.c.l.b16 %v467
    %v507 = vunpack.c.l.b16 %v468
    %v508 = vpack.c.b16 %v493, %v492
    %v509 = vpack.c.b16 %v495, %v494
    %v510 = vpack.c.b16 %v497, %v496
    %v511 = vpack.c.b16 %v499, %v498
    %v512 = vpack.c.b16 %v501, %v500
    %v513 = vpack.c.b16 %v503, %v502
    %v514 = vpack.c.b16 %v505, %v504
    %v515 = vpack.c.b16 %v507, %v506
    %524 = vmatprep.subr.bf16.mxu0 0
    %525 = vmatpush1.bf16.msra.mxu0 %v508
    %526 = vmatprep.subr.bf16.mxu0 0
    %527 = vmatpush1.bf16.msra.mxu0 %v509
    %528 = vmatprep.subr.bf16.mxu0 0
    %529 = vmatpush1.bf16.msra.mxu0 %v510
    %530 = vmatprep.subr.bf16.mxu0 0
    %531 = vmatpush1.bf16.msra.mxu0 %v511
    %532 = vmatprep.subr.bf16.mxu0 0
    %533 = vmatpush1.bf16.msra.mxu0 %v512
    %534 = vmatprep.subr.bf16.mxu0 0
    %535 = vmatpush1.bf16.msra.mxu0 %v513
    %536 = vmatprep.subr.bf16.mxu0 0
    %537 = vmatpush1.bf16.msra.mxu0 %v514
    %538 = vmatprep.subr.bf16.mxu0 0
    %539 = vmatpush1.bf16.msra.mxu0 %v515
    %540 = vmatprep.subr.bf16.mxu0 0
    %541 = vmatpush1.bf16.msra.mxu0 0
    %542 = vmatprep.subr.bf16.mxu0 0
    %543 = vmatpush1.bf16.msra.mxu0 0
    %544 = vmatprep.subr.bf16.mxu0 0
    %545 = vmatpush1.bf16.msra.mxu0 0
    %546 = vmatprep.subr.bf16.mxu0 0
    %547 = vmatpush1.bf16.msra.mxu0 0
    %548 = vmatprep.subr.bf16.mxu0 0
    %549 = vmatpush1.bf16.msra.mxu0 0
    %550 = vmatprep.subr.bf16.mxu0 0
    %551 = vmatpush1.bf16.msra.mxu0 0
    %552 = vmatprep.subr.bf16.mxu0 0
    %553 = vmatpush1.bf16.msra.mxu0 0
    %554 = vmatprep.subr.bf16.mxu0 0
    %555 = vmatpush1.bf16.msra.mxu0 0
    %556 = vmatprep.mubr.bf16.mxu0 0
    %557 = vmatmul.mubr.bf16.gmra.mrb[0].mxu0 %v452
    %v558 = vpop.f32.mrb[0].mxu0
    %v559 = vadd.f32 %v474, %v558
    %v560 = vpop.f32.mrb[0].mxu0
    %v561 = vpop.f32.mrb[0].mxu0
    %v562 = vpop.f32.mrb[0].mxu0
    %563 = vdwg.mxu0
    %vm564 = vcmask 31744
    %565 = vst.msk [vmem:[%s9] sm:$0xff] %vm564, %v559
    // Predicated region
    $region46: #{tpu_custom_call.1} parent=1 // pred_check
      _
    $region47: #{tpu_custom_call.1} parent=1 // pred_check_branch
      %567 = sbr.rel (0) target = $region49
    $region48: #{tpu_custom_call.1} parent=1 // pred_region
      _
    $region49: #{tpu_custom_call.1} parent=1 // pred_fallthru
      _
    // Predicated region
    $region50: #{tpu_custom_call.1} parent=1 // pred_check
      _
    $region51: #{tpu_custom_call.1} parent=1 // pred_check_branch
      %569 = sbr.rel (0) target = $region53
    $region52: #{tpu_custom_call.1} parent=1 // pred_region
      _
    $region53: #{tpu_custom_call.1} parent=1 // pred_fallthru
      _
    %570 = vsyncpa [#allocation3], 1
    %571 = vsyncpa [#allocation5], 1

</llo_original>
